<compile_context>
chip_gen: v5e
topology: v5e:2x2
jax: 0.10.0
libtpu: 0.0.40
codegen_flags: <defaults>
</compile_context>

<pallas_src>
import re

import jax
import jax.numpy as jnp
from jax.experimental import pallas as pl
from jax.experimental.pallas import tpu as pltpu

_LANE = 128
_SUBLANE = 8


def _cdiv(a, b):
    return -(-a // b)


def _round_up(a, b):
    return _cdiv(a, b) * b


def _reference(inputs, targets):
    """Pure-JAX reference mirroring the torch semantics (also the small-input path)."""
    x = inputs.astype(jnp.float32)
    t = targets.astype(jnp.float32)
    d0 = jnp.diff(x, axis=0) - jnp.diff(t, axis=0)
    d1 = jnp.diff(x, axis=1) - jnp.diff(t, axis=1)
    gd = d0 ** 2 + d1 ** 2
    return jnp.sum(gd) / inputs.size


def _tpu_defaults():
    """(num_shards, max_block_rows, core_parallel) for the local TPU generation."""
    num_shards, max_block_rows, core_parallel = 1, 1024, False
    try:
        kind = jax.devices()[0].device_kind.lower()
    except Exception:
        return num_shards, max_block_rows, core_parallel
    m = re.search(r"(\d+)", kind)
    gen = int(m.group(1)) if m else 0
    if gen >= 6:
        # 2 inputs x 2 buffers x 4 MiB (f32, 2048 rows) + tiny output ~= 17 MiB
        # < 32 MiB scoped-VMEM default on v6e/v7x.
        max_block_rows = 2048
    if gen >= 7:
        num_shards = 2          # one shard per TensorCore on v7x
        core_parallel = True    # genuinely split the shard axis across the 2 TCs
    elif ("v4" in kind) or ("v5p" in kind):
        num_shards = 2          # megacore: "parallel" axis is split across cores
    return num_shards, max_block_rows, core_parallel


def _make_gdl_kernel(rows, steps, block_rows, ragged):
    """Kernel for grid (num_shards, steps); blocks are (2, 2, block_rows, 128)."""

    def kernel(x_ref, t_ref, o_ref):
        p = pl.program_id(0)
        step = pl.program_id(1)

        @pl.when(step == 0)
        def _():
            o_ref[...] = jnp.zeros_like(o_ref)

        # Subtract in the input dtype (bf16 native on v6e/v7x VPU); cast only
        # the 4 diff planes to f32 before squaring / accumulating.
        u00 = x_ref[0, 0] - t_ref[0, 0]
        u01 = x_ref[0, 1] - t_ref[0, 1]
        u10 = x_ref[1, 0] - t_ref[1, 0]
        u11 = x_ref[1, 1] - t_ref[1, 1]
        d0c0 = (u10 - u00).astype(jnp.float32)   # diff along batch axis, channel 0
        d0c1 = (u11 - u01).astype(jnp.float32)   # diff along batch axis, channel 1
        d1n0 = (u01 - u00).astype(jnp.float32)   # diff along channel axis, batch 0
        d1n1 = (u11 - u10).astype(jnp.float32)   # diff along channel axis, batch 1
        sq = d0c0 * d0c0 + d0c1 * d0c1 + d1n0 * d1n0 + d1n1 * d1n1

        def accumulate(vals):
            # Fold (block_rows, 128) -> (8, 128): vreg-aligned reshape + VALU adds,
            # accumulated straight into the resident output block.
            o_ref[...] += vals.reshape(-1, _SUBLANE, _LANE).sum(axis=0)[None]

        if not ragged:
            accumulate(sq)
        else:
            row0 = (p * steps + step) * block_rows

            @pl.when(row0 + block_rows <= rows)
            def _():
                accumulate(sq)

            @pl.when(row0 + block_rows > rows)
            def _():
                # Only the ragged tail block(s) pay for the iota + select;
                # rows past the array extent contribute exactly 0.
                ridx = jax.lax.broadcasted_iota(jnp.int32, sq.shape, 0) + row0
                accumulate(jnp.where(ridx < rows, sq, 0.0))

    return kernel


def gradient_difference_loss(inputs, targets, *, num_shards=None,
                             max_block_rows=None, min_pallas_rows=64):
    """Pallas TPU implementation of GradientDifferenceLoss.forward."""
    assert inputs.shape == targets.shape
    assert inputs.ndim == 4
    n, c = int(inputs.shape[0]), int(inputs.shape[1])
    # Same constraint as the PyTorch broadcast in the original module.
    assert n == 2 and c == 2, "torch broadcast in the reference requires N=2, C=2"

    numel = int(inputs.size)
    hw = numel // (n * c)

    # Tiny inputs: the fused-XLA expression beats pallas_call launch overhead.
    if hw < min_pallas_rows * _LANE:
        return _reference(inputs, targets)

    d_shards, d_rows, core_parallel = _tpu_defaults()
    num_shards = d_shards if num_shards is None else int(num_shards)
    max_block_rows = d_rows if max_block_rows is None else int(max_block_rows)

    itemsize = inputs.dtype.itemsize
    g_rows = _SUBLANE * max(1, 4 // itemsize)   # sublane packing: f32->8, bf16->16
    g_hw = g_rows * _LANE

    # Lane-dense view over the flattened spatial axis.  Pad (= copy) only up to
    # the minimal sublane*lane boundary — never to a block multiple; typical
    # H*W sizes are already aligned so no copy happens at all.
    hw_pad = _round_up(hw, g_hw)
    rows = hw_pad // _LANE

    def _prep(a):
        a = a.reshape(n, c, hw)
        if hw_pad != hw:
            # Zero padding contributes exactly 0 (diffs are along N/C only).
            # TODO(synk): a flat (n, c, hw) layout with 1-D blocks would avoid
            # even this boundary-pad copy for unaligned H*W.
            a = jnp.pad(a, ((0, 0), (0, 0), (0, hw_pad - hw)))
        return a.reshape(n, c, rows, _LANE)      # contiguous reshape: no copy

    xr = _prep(inputs)
    tr = _prep(targets)

    # Tight tiling: the grid covers `rows` with at most one ragged block per
    # shard (masked in-kernel) instead of padding rows to a block multiple.
    nb = _round_up(max(_cdiv(rows, max_block_rows), 1), num_shards)
    steps = nb // num_shards
    block_rows = _round_up(_cdiv(rows, nb), g_rows)
    ragged = (nb * block_rows) != rows

    block = (n, c, block_rows, _LANE)

    def in_map(p, i):
        return (0, 0, p * steps + i, 0)

    if core_parallel and num_shards > 1 and hasattr(pltpu, "CORE_PARALLEL"):
        dims = (pltpu.CORE_PARALLEL, pltpu.ARBITRARY)   # v7x: one shard per TC
    else:
        dims = ("parallel", "arbitrary")

    cost = pl.CostEstimate(
        flops=4 * numel,
        transcendentals=0,
        bytes_accessed=2 * numel * itemsize + num_shards * _SUBLANE * _LANE * 4,
    )

    partials = pl.pallas_call(
        _make_gdl_kernel(rows, steps, block_rows, ragged),
        out_shape=jax.ShapeDtypeStruct((num_shards, _SUBLANE, _LANE), jnp.float32),
        grid_spec=pltpu.PrefetchScalarGridSpec(
            num_scalar_prefetch=0,
            grid=(num_shards, steps),
            in_specs=[pl.BlockSpec(block, in_map),
                      pl.BlockSpec(block, in_map)],
            out_specs=pl.BlockSpec((1, _SUBLANE, _LANE), lambda p, i: (p, 0, 0)),
        ),
        compiler_params=pltpu.CompilerParams(dimension_semantics=dims),
        cost_estimate=cost,
    )(xr, tr)

    # Factor 2 is exact because N == C == 2 replicates each diff plane twice in
    # the torch broadcast; 1/numel is applied exactly once, here.
    return jnp.sum(partials) * (2.0 / numel)


if __name__ == "__main__":
    key = jax.random.PRNGKey(0)
    ks = jax.random.split(key, 8)

    # 1) 1024-aligned spatial size: main streaming Pallas path, zero padding.
    shape = (2, 2, 128, 256)
    x = jax.random.normal(ks[0], shape, dtype=jnp.float32)
    t = jax.random.normal(ks[1], shape, dtype=jnp.float32)
    loss = jax.block_until_ready(gradient_difference_loss(x, t))
    ref = jax.block_until_ready(_reference(x, t))
    assert jnp.allclose(loss, ref, rtol=1e-5, atol=1e-5), (loss, ref)

    # 2) Tiny input: dispatches to the fused-XLA expression.
    shape2 = (2, 2, 16, 16)
    x2 = jax.random.normal(ks[2], shape2, dtype=jnp.float32)
    t2 = jax.random.normal(ks[3], shape2, dtype=jnp.float32)
    loss2 = jax.block_until_ready(gradient_difference_loss(x2, t2))
    ref2 = jax.block_until_ready(_reference(x2, t2))
    assert jnp.allclose(loss2, ref2, rtol=1e-5, atol=1e-5), (loss2, ref2)

    # 3) Forced 2-shard grid with a ragged, in-kernel-masked tail block.
    shape3 = (2, 2, 96, 96)
    x3 = jax.random.normal(ks[4], shape3, dtype=jnp.float32)
    t3 = jax.random.normal(ks[5], shape3, dtype=jnp.float32)
    loss3 = jax.block_until_ready(gradient_difference_loss(x3, t3, num_shards=2))
    ref3 = jax.block_until_ready(_reference(x3, t3))
    assert jnp.allclose(loss3, ref3, rtol=1e-5, atol=1e-5), (loss3, ref3)

    # 4) bf16 inputs: halved HBM traffic; subtraction stays in bf16 in-kernel.
    shape4 = (2, 2, 128, 128)
    x4 = jax.random.normal(ks[6], shape4, dtype=jnp.bfloat16)
    t4 = jax.random.normal(ks[7], shape4, dtype=jnp.bfloat16)
    loss4 = jax.block_until_ready(gradient_difference_loss(x4, t4))
    ref4 = jax.block_until_ready(_reference(x4, t4))
    assert jnp.allclose(loss4, ref4, rtol=5e-2, atol=1e-3), (loss4, ref4)

    print("KERNEL_OK")
</pallas_src>

<mosaic_0001>
module attributes {stable_mosaic.version = 11 : i64} {
  func.func @kernel(%arg0: i32, %arg1: i32, %arg2: memref<2x2x256x128xf32, #tpu.memory_space<vmem>>, %arg3: memref<2x2x256x128xf32, #tpu.memory_space<vmem>>, %arg4: memref<1x8x128xf32, #tpu.memory_space<vmem>>) attributes {dimension_semantics = [#tpu.dimension_semantics<parallel>, #tpu.dimension_semantics<arbitrary>], iteration_bounds = array<i64: 1, 1>, scalar_prefetch = 0 : i64, scratch_operands = 0 : i64, tpu.core_type = #tpu.core_type<tc>, window_params = [{transform_indices = @transform_0, window_bounds = array<i64: 2, 2, 256, 128>}, {transform_indices = @transform_1, window_bounds = array<i64: 2, 2, 256, 128>}, {transform_indices = @transform_2, window_bounds = array<i64: 1, 8, 128>}]} {
    %c0_i32 = arith.constant 0 : i32
    %0 = arith.cmpi eq, %arg1, %c0_i32 : i32
    %1 = arith.extui %0 : i1 to i32
    %c0_i32_0 = arith.constant 0 : i32
    %2 = arith.cmpi ne, %1, %c0_i32_0 : i32
    scf.if %2 {
      %cst_37 = arith.constant 0.000000e+00 : f32
      %40 = vector.broadcast %cst_37 : f32 to vector<1x8x128xf32>
      %c0_38 = arith.constant 0 : index
      %c0_39 = arith.constant 0 : index
      %c0_40 = arith.constant 0 : index
      %41 = vector.load %arg4[%c0_38, %c0_39, %c0_40] : memref<1x8x128xf32, #tpu.memory_space<vmem>>, vector<1x8x128xf32>
      tpu.vector_store %arg4[%c0_38, %c0_39, %c0_40], %40 {strides = array<i32>} : memref<1x8x128xf32, #tpu.memory_space<vmem>>, vector<1x8x128xf32>,
    } else {
    }
    %c0 = arith.constant 0 : index
    %c0_1 = arith.constant 0 : index
    %c0_2 = arith.constant 0 : index
    %c0_3 = arith.constant 0 : index
    %3 = vector.load %arg2[%c0, %c0_1, %c0_2, %c0_3] : memref<2x2x256x128xf32, #tpu.memory_space<vmem>>, vector<1x1x256x128xf32>
    %4 = vector.shape_cast %3 : vector<1x1x256x128xf32> to vector<256x128xf32>
    %c0_4 = arith.constant 0 : index
    %c0_5 = arith.constant 0 : index
    %c0_6 = arith.constant 0 : index
    %c0_7 = arith.constant 0 : index
    %5 = vector.load %arg3[%c0_4, %c0_5, %c0_6, %c0_7] : memref<2x2x256x128xf32, #tpu.memory_space<vmem>>, vector<1x1x256x128xf32>
    %6 = vector.shape_cast %5 : vector<1x1x256x128xf32> to vector<256x128xf32>
    %7 = arith.subf %4, %6 : vector<256x128xf32>
    %c0_8 = arith.constant 0 : index
    %c1 = arith.constant 1 : index
    %c0_9 = arith.constant 0 : index
    %c0_10 = arith.constant 0 : index
    %8 = vector.load %arg2[%c0_8, %c1, %c0_9, %c0_10] : memref<2x2x256x128xf32, #tpu.memory_space<vmem>>, vector<1x1x256x128xf32>
    %9 = vector.shape_cast %8 : vector<1x1x256x128xf32> to vector<256x128xf32>
    %c0_11 = arith.constant 0 : index
    %c1_12 = arith.constant 1 : index
    %c0_13 = arith.constant 0 : index
    %c0_14 = arith.constant 0 : index
    %10 = vector.load %arg3[%c0_11, %c1_12, %c0_13, %c0_14] : memref<2x2x256x128xf32, #tpu.memory_space<vmem>>, vector<1x1x256x128xf32>
    %11 = vector.shape_cast %10 : vector<1x1x256x128xf32> to vector<256x128xf32>
    %12 = arith.subf %9, %11 : vector<256x128xf32>
    %c1_15 = arith.constant 1 : index
    %c0_16 = arith.constant 0 : index
    %c0_17 = arith.constant 0 : index
    %c0_18 = arith.constant 0 : index
    %13 = vector.load %arg2[%c1_15, %c0_16, %c0_17, %c0_18] : memref<2x2x256x128xf32, #tpu.memory_space<vmem>>, vector<1x1x256x128xf32>
    %14 = vector.shape_cast %13 : vector<1x1x256x128xf32> to vector<256x128xf32>
    %c1_19 = arith.constant 1 : index
    %c0_20 = arith.constant 0 : index
    %c0_21 = arith.constant 0 : index
    %c0_22 = arith.constant 0 : index
    %15 = vector.load %arg3[%c1_19, %c0_20, %c0_21, %c0_22] : memref<2x2x256x128xf32, #tpu.memory_space<vmem>>, vector<1x1x256x128xf32>
    %16 = vector.shape_cast %15 : vector<1x1x256x128xf32> to vector<256x128xf32>
    %17 = arith.subf %14, %16 : vector<256x128xf32>
    %c1_23 = arith.constant 1 : index
    %c1_24 = arith.constant 1 : index
    %c0_25 = arith.constant 0 : index
    %c0_26 = arith.constant 0 : index
    %18 = vector.load %arg2[%c1_23, %c1_24, %c0_25, %c0_26] : memref<2x2x256x128xf32, #tpu.memory_space<vmem>>, vector<1x1x256x128xf32>
    %19 = vector.shape_cast %18 : vector<1x1x256x128xf32> to vector<256x128xf32>
    %c1_27 = arith.constant 1 : index
    %c1_28 = arith.constant 1 : index
    %c0_29 = arith.constant 0 : index
    %c0_30 = arith.constant 0 : index
    %20 = vector.load %arg3[%c1_27, %c1_28, %c0_29, %c0_30] : memref<2x2x256x128xf32, #tpu.memory_space<vmem>>, vector<1x1x256x128xf32>
    %21 = vector.shape_cast %20 : vector<1x1x256x128xf32> to vector<256x128xf32>
    %22 = arith.subf %19, %21 : vector<256x128xf32>
    %23 = arith.subf %17, %7 : vector<256x128xf32>
    %24 = arith.subf %22, %12 : vector<256x128xf32>
    %25 = arith.subf %12, %7 : vector<256x128xf32>
    %26 = arith.subf %22, %17 : vector<256x128xf32>
    %27 = arith.mulf %23, %23 : vector<256x128xf32>
    %28 = arith.mulf %24, %24 : vector<256x128xf32>
    %29 = arith.addf %27, %28 : vector<256x128xf32>
    %30 = arith.mulf %25, %25 : vector<256x128xf32>
    %31 = arith.addf %29, %30 : vector<256x128xf32>
    %32 = arith.mulf %26, %26 : vector<256x128xf32>
    %33 = arith.addf %31, %32 : vector<256x128xf32>
    %c0_31 = arith.constant 0 : index
    %c0_32 = arith.constant 0 : index
    %c0_33 = arith.constant 0 : index
    %34 = vector.load %arg4[%c0_31, %c0_32, %c0_33] : memref<1x8x128xf32, #tpu.memory_space<vmem>>, vector<1x8x128xf32>
    %35 = vector.shape_cast %33 : vector<256x128xf32> to vector<32x8x128xf32>
    %cst = arith.constant dense<0.000000e+00> : vector<8x128xf32>
    %36 = vector.multi_reduction <add>, %35, %cst [0] : vector<32x8x128xf32> to vector<8x128xf32>
    %37 = vector.shape_cast %36 : vector<8x128xf32> to vector<1x8x128xf32>
    %38 = arith.addf %34, %37 : vector<1x8x128xf32>
    %c0_34 = arith.constant 0 : index
    %c0_35 = arith.constant 0 : index
    %c0_36 = arith.constant 0 : index
    %39 = vector.load %arg4[%c0_34, %c0_35, %c0_36] : memref<1x8x128xf32, #tpu.memory_space<vmem>>, vector<1x8x128xf32>
    tpu.vector_store %arg4[%c0_34, %c0_35, %c0_36], %38 {strides = array<i32>} : memref<1x8x128xf32, #tpu.memory_space<vmem>>, vector<1x8x128xf32>,
    return
  }
  func.func @transform_0(%arg0: i32, %arg1: i32) -> (i32, i32, i32, i32) {
    %c1_i32 = arith.constant 1 : i32
    %0 = arith.muli %arg0, %c1_i32 : i32
    %1 = arith.addi %0, %arg1 : i32
    %c0_i32 = arith.constant 0 : i32
    %c0_i32_0 = arith.constant 0 : i32
    %c0_i32_1 = arith.constant 0 : i32
    %c0_i32_2 = arith.constant 0 : i32
    return %c0_i32, %c0_i32_0, %1, %c0_i32_1 : i32, i32, i32, i32
  }
  func.func @transform_1(%arg0: i32, %arg1: i32) -> (i32, i32, i32, i32) {
    %c1_i32 = arith.constant 1 : i32
    %0 = arith.muli %arg0, %c1_i32 : i32
    %1 = arith.addi %0, %arg1 : i32
    %c0_i32 = arith.constant 0 : i32
    %c0_i32_0 = arith.constant 0 : i32
    %c0_i32_1 = arith.constant 0 : i32
    %c0_i32_2 = arith.constant 0 : i32
    return %c0_i32, %c0_i32_0, %1, %c0_i32_1 : i32, i32, i32, i32
  }
  func.func @transform_2(%arg0: i32, %arg1: i32) -> (i32, i32, i32) {
    %c0_i32 = arith.constant 0 : i32
    %c0_i32_0 = arith.constant 0 : i32
    %c0_i32_1 = arith.constant 0 : i32
    return %arg0, %c0_i32, %c0_i32_0 : i32, i32, i32
  }
}

</mosaic_0001>

<llo_original>
// kernel: tpu_custom_call.1
$region0: #{tpu_custom_call.1}
  #allocation0 [shape = 'u32[]', space=smem, size = 0x4, offset = 0x4, fixed_abs, tag = 'smem constant byte address 0x4 - core index']
  #allocation1 [shape = 'u32[72,128]{1,0:T(1,128)}', space=vmem, size = 0x9000, scoped, tag = 'internal scratch']
  %s0 = inlined_call_operand.hbm [shape: f32[2,2,256,128], index: 0, kind: input, shape index: {}]
  %s1 = inlined_call_operand.hbm [shape: f32[2,2,256,128], index: 1, kind: input, shape index: {}]
  %s2 = inlined_call_operand.hbm [shape: f32[1,8,128], index: 2, kind: output, shape index: {}]
  %s3 = sld [smem:[#allocation0]]
  $region30: #{tpu_custom_call.1} parent=0
    _
  %s5 = ssub.s32 1, %s3
  %s6 = scalar_select 0, %s5, %s3
  $region1: #{tpu_custom_call.1} parent=0
    #allocation2 [shape = 'u8[524288]{0}', space=vmem, size = 0x80000, scoped, tag = 'input window, operand 0, single buffered']
    #allocation3 [shape = 's32[1]{0}', space=sflag, size = 0x4, scoped, tag = 'scoped memory for tpu_custom_call.1']
    #allocation4 [shape = 's32[1]{0}', space=sflag, size = 0x4, scoped, tag = 'scoped memory for tpu_custom_call.1']
    #allocation5 [shape = 'u8[524288]{0}', space=vmem, size = 0x80000, scoped, tag = 'input window, operand 1, single buffered']
    #allocation6 [shape = 's32[1]{0}', space=sflag, size = 0x4, scoped, tag = 'scoped memory for tpu_custom_call.1']
    #allocation7 [shape = 'u8[4096]{0}', space=vmem, size = 0x1000, scoped, tag = 'output window, operand 0, single buffered']
    %7 = vsyncpa [#allocation3], 0
    %8 = vsyncpa [#allocation6], 0
    %9 = vsyncpa [#allocation4], 0
    // Predicated region
    $region2: #{tpu_custom_call.1} parent=1 // pred_check
      _
    $region3: #{tpu_custom_call.1} parent=1 // pred_check_branch
      %11 = sbr.rel (0) target = $region5
    $region4: #{tpu_custom_call.1} parent=1 // pred_region
      %s12 = sadd.s32 0, 0
      %s13 = smul.u32 32, %s12
      %15 = vsyncadd [#allocation3], 0
      %s16 = smul.addr %s13, 8
      %s17 = scalar_lea.hbm %s0, %s16
      %s18 = sshll.u32 %s17, 4
      %s19 = int_to_ptr.hbm [resolvable:$true] %s18
      %s20 = sshll.u32 [#allocation2], 4
      %s21 = int_to_ptr.vmem [resolvable:$true] %s20
      %26 = dma.hbm_to_vmem [thread:$0]  %s19, 16384, %s21, [#allocation3], 128, 128, 8
    $region5: #{tpu_custom_call.1} parent=1 // pred_fallthru
      _
    // Predicated region
    $region6: #{tpu_custom_call.1} parent=1 // pred_check
      _
    $region7: #{tpu_custom_call.1} parent=1 // pred_check_branch
      %28 = sbr.rel (0) target = $region9
    $region8: #{tpu_custom_call.1} parent=1 // pred_region
      %s29 = sadd.s32 0, 0
      %s30 = smul.u32 32, %s29
      %32 = vsyncadd [#allocation6], 0
      %s33 = smul.addr %s30, 8
      %s34 = scalar_lea.hbm %s1, %s33
      %s35 = sshll.u32 %s34, 4
      %s36 = int_to_ptr.hbm [resolvable:$true] %s35
      %s37 = sshll.u32 [#allocation5], 4
      %s38 = int_to_ptr.vmem [resolvable:$true] %s37
      %43 = dma.hbm_to_vmem [thread:$0]  %s36, 16384, %s38, [#allocation6], 128, 128, 8
    $region9: #{tpu_custom_call.1} parent=1 // pred_fallthru
      _
    // Predicated region
    $region10: #{tpu_custom_call.1} parent=1 // pred_check
      _
    $region11: #{tpu_custom_call.1} parent=1 // pred_check_branch
      %45 = sbr.rel (0) target = $region13
    $region12: #{tpu_custom_call.1} parent=1 // pred_region
      %47 = dma.done [#allocation3], 16384
    $region13: #{tpu_custom_call.1} parent=1 // pred_fallthru
      _
    // Predicated region
    $region14: #{tpu_custom_call.1} parent=1 // pred_check
      _
    $region15: #{tpu_custom_call.1} parent=1 // pred_check_branch
      %49 = sbr.rel (0) target = $region17
    $region16: #{tpu_custom_call.1} parent=1 // pred_region
      %51 = dma.done [#allocation6], 16384
    $region17: #{tpu_custom_call.1} parent=1 // pred_fallthru
      _
    %s52 = sadd.s32 0, 0
    %s53 = smul.u32 32, %s52
    %s54 = sadd.s32 0, 0
    %s55 = smul.u32 32, %s54
    %p56 = scmp.eq.s32.totalorder 0, 0
    // Predicated region
    $region18: #{tpu_custom_call.1} parent=1 // pred_check
      %p57 = pneg %p56
    $region19: #{tpu_custom_call.1} parent=1 // pred_check_branch
      %59 = sbr.rel (%p57) target = $region21
    $region20: #{tpu_custom_call.1} parent=1 // pred_region
      %60 = vst [vmem:[#allocation7] sm:$0xff] 0.0
    $region21: #{tpu_custom_call.1} parent=1 // pred_fallthru
      _
    %v61 = vld [vmem:[#allocation2] sm:$0xff]
    %v62 = vld [vmem:[#allocation2 + $0x8] sm:$0xff]
    %v63 = vld [vmem:[#allocation2 + $0x10] sm:$0xff]
    %v64 = vld [vmem:[#allocation2 + $0x18] sm:$0xff]
    %v65 = vld [vmem:[#allocation2 + $0x20] sm:$0xff]
    %v66 = vld [vmem:[#allocation2 + $0x28] sm:$0xff]
    %v67 = vld [vmem:[#allocation2 + $0x30] sm:$0xff]
    %v68 = vld [vmem:[#allocation2 + $0x38] sm:$0xff]
    %v69 = vld [vmem:[#allocation2 + $0x40] sm:$0xff]
    %v70 = vld [vmem:[#allocation2 + $0x48] sm:$0xff]
    %v71 = vld [vmem:[#allocation2 + $0x50] sm:$0xff]
    %v72 = vld [vmem:[#allocation2 + $0x58] sm:$0xff]
    %v73 = vld [vmem:[#allocation2 + $0x60] sm:$0xff]
    %v74 = vld [vmem:[#allocation2 + $0x68] sm:$0xff]
    %v75 = vld [vmem:[#allocation2 + $0x70] sm:$0xff]
    %v76 = vld [vmem:[#allocation2 + $0x78] sm:$0xff]
    %v77 = vld [vmem:[#allocation2 + $0x80] sm:$0xff]
    %v78 = vld [vmem:[#allocation2 + $0x88] sm:$0xff]
    %v79 = vld [vmem:[#allocation2 + $0x90] sm:$0xff]
    %v80 = vld [vmem:[#allocation2 + $0x98] sm:$0xff]
    %v81 = vld [vmem:[#allocation2 + $0xa0] sm:$0xff]
    %v82 = vld [vmem:[#allocation2 + $0xa8] sm:$0xff]
    %v83 = vld [vmem:[#allocation2 + $0xb0] sm:$0xff]
    %v84 = vld [vmem:[#allocation2 + $0xb8] sm:$0xff]
    %v85 = vld [vmem:[#allocation2 + $0xc0] sm:$0xff]
    %v86 = vld [vmem:[#allocation2 + $0xc8] sm:$0xff]
    %v87 = vld [vmem:[#allocation2 + $0xd0] sm:$0xff]
    %v88 = vld [vmem:[#allocation2 + $0xd8] sm:$0xff]
    %v89 = vld [vmem:[#allocation2 + $0xe0] sm:$0xff]
    %v90 = vld [vmem:[#allocation2 + $0xe8] sm:$0xff]
    %v91 = vld [vmem:[#allocation2 + $0xf0] sm:$0xff]
    %v92 = vld [vmem:[#allocation2 + $0xf8] sm:$0xff]
    %v93 = vld [vmem:[#allocation5] sm:$0xff]
    %v94 = vld [vmem:[#allocation5 + $0x8] sm:$0xff]
    %v95 = vld [vmem:[#allocation5 + $0x10] sm:$0xff]
    %v96 = vld [vmem:[#allocation5 + $0x18] sm:$0xff]
    %v97 = vld [vmem:[#allocation5 + $0x20] sm:$0xff]
    %v98 = vld [vmem:[#allocation5 + $0x28] sm:$0xff]
    %v99 = vld [vmem:[#allocation5 + $0x30] sm:$0xff]
    %v100 = vld [vmem:[#allocation5 + $0x38] sm:$0xff]
    %v101 = vld [vmem:[#allocation5 + $0x40] sm:$0xff]
    %v102 = vld [vmem:[#allocation5 + $0x48] sm:$0xff]
    %v103 = vld [vmem:[#allocation5 + $0x50] sm:$0xff]
    %v104 = vld [vmem:[#allocation5 + $0x58] sm:$0xff]
    %v105 = vld [vmem:[#allocation5 + $0x60] sm:$0xff]
    %v106 = vld [vmem:[#allocation5 + $0x68] sm:$0xff]
    %v107 = vld [vmem:[#allocation5 + $0x70] sm:$0xff]
    %v108 = vld [vmem:[#allocation5 + $0x78] sm:$0xff]
    %v109 = vld [vmem:[#allocation5 + $0x80] sm:$0xff]
    %v110 = vld [vmem:[#allocation5 + $0x88] sm:$0xff]
    %v111 = vld [vmem:[#allocation5 + $0x90] sm:$0xff]
    %v112 = vld [vmem:[#allocation5 + $0x98] sm:$0xff]
    %v113 = vld [vmem:[#allocation5 + $0xa0] sm:$0xff]
    %v114 = vld [vmem:[#allocation5 + $0xa8] sm:$0xff]
    %v115 = vld [vmem:[#allocation5 + $0xb0] sm:$0xff]
    %v116 = vld [vmem:[#allocation5 + $0xb8] sm:$0xff]
    %v117 = vld [vmem:[#allocation5 + $0xc0] sm:$0xff]
    %v118 = vld [vmem:[#allocation5 + $0xc8] sm:$0xff]
    %v119 = vld [vmem:[#allocation5 + $0xd0] sm:$0xff]
    %v120 = vld [vmem:[#allocation5 + $0xd8] sm:$0xff]
    %v121 = vld [vmem:[#allocation5 + $0xe0] sm:$0xff]
    %v122 = vld [vmem:[#allocation5 + $0xe8] sm:$0xff]
    %v123 = vld [vmem:[#allocation5 + $0xf0] sm:$0xff]
    %v124 = vld [vmem:[#allocation5 + $0xf8] sm:$0xff]
    %v125 = vsub.f32 %v61, %v93
    %v126 = vsub.f32 %v62, %v94
    %v127 = vsub.f32 %v63, %v95
    %v128 = vsub.f32 %v64, %v96
    %v129 = vsub.f32 %v65, %v97
    %v130 = vsub.f32 %v66, %v98
    %v131 = vsub.f32 %v67, %v99
    %v132 = vsub.f32 %v68, %v100
    %v133 = vsub.f32 %v69, %v101
    %v134 = vsub.f32 %v70, %v102
    %v135 = vsub.f32 %v71, %v103
    %v136 = vsub.f32 %v72, %v104
    %v137 = vsub.f32 %v73, %v105
    %v138 = vsub.f32 %v74, %v106
    %v139 = vsub.f32 %v75, %v107
    %v140 = vsub.f32 %v76, %v108
    %v141 = vsub.f32 %v77, %v109
    %v142 = vsub.f32 %v78, %v110
    %v143 = vsub.f32 %v79, %v111
    %v144 = vsub.f32 %v80, %v112
    %v145 = vsub.f32 %v81, %v113
    %v146 = vsub.f32 %v82, %v114
    %v147 = vsub.f32 %v83, %v115
    %v148 = vsub.f32 %v84, %v116
    %v149 = vsub.f32 %v85, %v117
    %v150 = vsub.f32 %v86, %v118
    %v151 = vsub.f32 %v87, %v119
    %v152 = vsub.f32 %v88, %v120
    %v153 = vsub.f32 %v89, %v121
    %v154 = vsub.f32 %v90, %v122
    %v155 = vsub.f32 %v91, %v123
    %v156 = vsub.f32 %v92, %v124
    %s157 = scalar_lea.vmem [#allocation2], 256
    %v158 = vld [vmem:[%s157] sm:$0xff]
    %v159 = vld [vmem:[%s157 + $0x8] sm:$0xff]
    %v160 = vld [vmem:[%s157 + $0x10] sm:$0xff]
    %v161 = vld [vmem:[%s157 + $0x18] sm:$0xff]
    %v162 = vld [vmem:[%s157 + $0x20] sm:$0xff]
    %v163 = vld [vmem:[%s157 + $0x28] sm:$0xff]
    %v164 = vld [vmem:[%s157 + $0x30] sm:$0xff]
    %v165 = vld [vmem:[%s157 + $0x38] sm:$0xff]
    %v166 = vld [vmem:[%s157 + $0x40] sm:$0xff]
    %v167 = vld [vmem:[%s157 + $0x48] sm:$0xff]
    %v168 = vld [vmem:[%s157 + $0x50] sm:$0xff]
    %v169 = vld [vmem:[%s157 + $0x58] sm:$0xff]
    %v170 = vld [vmem:[%s157 + $0x60] sm:$0xff]
    %v171 = vld [vmem:[%s157 + $0x68] sm:$0xff]
    %v172 = vld [vmem:[%s157 + $0x70] sm:$0xff]
    %v173 = vld [vmem:[%s157 + $0x78] sm:$0xff]
    %v174 = vld [vmem:[%s157 + $0x80] sm:$0xff]
    %v175 = vld [vmem:[%s157 + $0x88] sm:$0xff]
    %v176 = vld [vmem:[%s157 + $0x90] sm:$0xff]
    %v177 = vld [vmem:[%s157 + $0x98] sm:$0xff]
    %v178 = vld [vmem:[%s157 + $0xa0] sm:$0xff]
    %v179 = vld [vmem:[%s157 + $0xa8] sm:$0xff]
    %v180 = vld [vmem:[%s157 + $0xb0] sm:$0xff]
    %v181 = vld [vmem:[%s157 + $0xb8] sm:$0xff]
    %v182 = vld [vmem:[%s157 + $0xc0] sm:$0xff]
    %v183 = vld [vmem:[%s157 + $0xc8] sm:$0xff]
    %v184 = vld [vmem:[%s157 + $0xd0] sm:$0xff]
    %v185 = vld [vmem:[%s157 + $0xd8] sm:$0xff]
    %v186 = vld [vmem:[%s157 + $0xe0] sm:$0xff]
    %v187 = vld [vmem:[%s157 + $0xe8] sm:$0xff]
    %v188 = vld [vmem:[%s157 + $0xf0] sm:$0xff]
    %v189 = vld [vmem:[%s157 + $0xf8] sm:$0xff]
    %s190 = scalar_lea.vmem [#allocation5], 256
    %v191 = vld [vmem:[%s190] sm:$0xff]
    %v192 = vld [vmem:[%s190 + $0x8] sm:$0xff]
    %v193 = vld [vmem:[%s190 + $0x10] sm:$0xff]
    %v194 = vld [vmem:[%s190 + $0x18] sm:$0xff]
    %v195 = vld [vmem:[%s190 + $0x20] sm:$0xff]
    %v196 = vld [vmem:[%s190 + $0x28] sm:$0xff]
    %v197 = vld [vmem:[%s190 + $0x30] sm:$0xff]
    %v198 = vld [vmem:[%s190 + $0x38] sm:$0xff]
    %v199 = vld [vmem:[%s190 + $0x40] sm:$0xff]
    %v200 = vld [vmem:[%s190 + $0x48] sm:$0xff]
    %v201 = vld [vmem:[%s190 + $0x50] sm:$0xff]
    %v202 = vld [vmem:[%s190 + $0x58] sm:$0xff]
    %v203 = vld [vmem:[%s190 + $0x60] sm:$0xff]
    %v204 = vld [vmem:[%s190 + $0x68] sm:$0xff]
    %v205 = vld [vmem:[%s190 + $0x70] sm:$0xff]
    %v206 = vld [vmem:[%s190 + $0x78] sm:$0xff]
    %v207 = vld [vmem:[%s190 + $0x80] sm:$0xff]
    %v208 = vld [vmem:[%s190 + $0x88] sm:$0xff]
    %v209 = vld [vmem:[%s190 + $0x90] sm:$0xff]
    %v210 = vld [vmem:[%s190 + $0x98] sm:$0xff]
    %v211 = vld [vmem:[%s190 + $0xa0] sm:$0xff]
    %v212 = vld [vmem:[%s190 + $0xa8] sm:$0xff]
    %v213 = vld [vmem:[%s190 + $0xb0] sm:$0xff]
    %v214 = vld [vmem:[%s190 + $0xb8] sm:$0xff]
    %v215 = vld [vmem:[%s190 + $0xc0] sm:$0xff]
    %v216 = vld [vmem:[%s190 + $0xc8] sm:$0xff]
    %v217 = vld [vmem:[%s190 + $0xd0] sm:$0xff]
    %v218 = vld [vmem:[%s190 + $0xd8] sm:$0xff]
    %v219 = vld [vmem:[%s190 + $0xe0] sm:$0xff]
    %v220 = vld [vmem:[%s190 + $0xe8] sm:$0xff]
    %v221 = vld [vmem:[%s190 + $0xf0] sm:$0xff]
    %v222 = vld [vmem:[%s190 + $0xf8] sm:$0xff]
    %v223 = vsub.f32 %v158, %v191
    %v224 = vsub.f32 %v159, %v192
    %v225 = vsub.f32 %v160, %v193
    %v226 = vsub.f32 %v161, %v194
    %v227 = vsub.f32 %v162, %v195
    %v228 = vsub.f32 %v163, %v196
    %v229 = vsub.f32 %v164, %v197
    %v230 = vsub.f32 %v165, %v198
    %v231 = vsub.f32 %v166, %v199
    %v232 = vsub.f32 %v167, %v200
    %v233 = vsub.f32 %v168, %v201
    %v234 = vsub.f32 %v169, %v202
    %v235 = vsub.f32 %v170, %v203
    %v236 = vsub.f32 %v171, %v204
    %v237 = vsub.f32 %v172, %v205
    %v238 = vsub.f32 %v173, %v206
    %v239 = vsub.f32 %v174, %v207
    %v240 = vsub.f32 %v175, %v208
    %v241 = vsub.f32 %v176, %v209
    %v242 = vsub.f32 %v177, %v210
    %v243 = vsub.f32 %v178, %v211
    %v244 = vsub.f32 %v179, %v212
    %v245 = vsub.f32 %v180, %v213
    %v246 = vsub.f32 %v181, %v214
    %v247 = vsub.f32 %v182, %v215
    %v248 = vsub.f32 %v183, %v216
    %v249 = vsub.f32 %v184, %v217
    %v250 = vsub.f32 %v185, %v218
    %v251 = vsub.f32 %v186, %v219
    %v252 = vsub.f32 %v187, %v220
    %v253 = vsub.f32 %v188, %v221
    %v254 = vsub.f32 %v189, %v222
    %s255 = scalar_lea.vmem [#allocation2], 512
    %v256 = vld [vmem:[%s255] sm:$0xff]
    %v257 = vld [vmem:[%s255 + $0x8] sm:$0xff]
    %v258 = vld [vmem:[%s255 + $0x10] sm:$0xff]
    %v259 = vld [vmem:[%s255 + $0x18] sm:$0xff]
    %v260 = vld [vmem:[%s255 + $0x20] sm:$0xff]
    %v261 = vld [vmem:[%s255 + $0x28] sm:$0xff]
    %v262 = vld [vmem:[%s255 + $0x30] sm:$0xff]
    %v263 = vld [vmem:[%s255 + $0x38] sm:$0xff]
    %v264 = vld [vmem:[%s255 + $0x40] sm:$0xff]
    %v265 = vld [vmem:[%s255 + $0x48] sm:$0xff]
    %v266 = vld [vmem:[%s255 + $0x50] sm:$0xff]
    %v267 = vld [vmem:[%s255 + $0x58] sm:$0xff]
    %v268 = vld [vmem:[%s255 + $0x60] sm:$0xff]
    %v269 = vld [vmem:[%s255 + $0x68] sm:$0xff]
    %v270 = vld [vmem:[%s255 + $0x70] sm:$0xff]
    %v271 = vld [vmem:[%s255 + $0x78] sm:$0xff]
    %v272 = vld [vmem:[%s255 + $0x80] sm:$0xff]
    %v273 = vld [vmem:[%s255 + $0x88] sm:$0xff]
    %v274 = vld [vmem:[%s255 + $0x90] sm:$0xff]
    %v275 = vld [vmem:[%s255 + $0x98] sm:$0xff]
    %v276 = vld [vmem:[%s255 + $0xa0] sm:$0xff]
    %v277 = vld [vmem:[%s255 + $0xa8] sm:$0xff]
    %v278 = vld [vmem:[%s255 + $0xb0] sm:$0xff]
    %v279 = vld [vmem:[%s255 + $0xb8] sm:$0xff]
    %v280 = vld [vmem:[%s255 + $0xc0] sm:$0xff]
    %v281 = vld [vmem:[%s255 + $0xc8] sm:$0xff]
    %v282 = vld [vmem:[%s255 + $0xd0] sm:$0xff]
    %v283 = vld [vmem:[%s255 + $0xd8] sm:$0xff]
    %v284 = vld [vmem:[%s255 + $0xe0] sm:$0xff]
    %v285 = vld [vmem:[%s255 + $0xe8] sm:$0xff]
    %v286 = vld [vmem:[%s255 + $0xf0] sm:$0xff]
    %v287 = vld [vmem:[%s255 + $0xf8] sm:$0xff]
    %s288 = scalar_lea.vmem [#allocation5], 512
    %v289 = vld [vmem:[%s288] sm:$0xff]
    %v290 = vld [vmem:[%s288 + $0x8] sm:$0xff]
    %v291 = vld [vmem:[%s288 + $0x10] sm:$0xff]
    %v292 = vld [vmem:[%s288 + $0x18] sm:$0xff]
    %v293 = vld [vmem:[%s288 + $0x20] sm:$0xff]
    %v294 = vld [vmem:[%s288 + $0x28] sm:$0xff]
    %v295 = vld [vmem:[%s288 + $0x30] sm:$0xff]
    %v296 = vld [vmem:[%s288 + $0x38] sm:$0xff]
    %v297 = vld [vmem:[%s288 + $0x40] sm:$0xff]
    %v298 = vld [vmem:[%s288 + $0x48] sm:$0xff]
    %v299 = vld [vmem:[%s288 + $0x50] sm:$0xff]
    %v300 = vld [vmem:[%s288 + $0x58] sm:$0xff]
    %v301 = vld [vmem:[%s288 + $0x60] sm:$0xff]
    %v302 = vld [vmem:[%s288 + $0x68] sm:$0xff]
    %v303 = vld [vmem:[%s288 + $0x70] sm:$0xff]
    %v304 = vld [vmem:[%s288 + $0x78] sm:$0xff]
    %v305 = vld [vmem:[%s288 + $0x80] sm:$0xff]
    %v306 = vld [vmem:[%s288 + $0x88] sm:$0xff]
    %v307 = vld [vmem:[%s288 + $0x90] sm:$0xff]
    %v308 = vld [vmem:[%s288 + $0x98] sm:$0xff]
    %v309 = vld [vmem:[%s288 + $0xa0] sm:$0xff]
    %v310 = vld [vmem:[%s288 + $0xa8] sm:$0xff]
    %v311 = vld [vmem:[%s288 + $0xb0] sm:$0xff]
    %v312 = vld [vmem:[%s288 + $0xb8] sm:$0xff]
    %v313 = vld [vmem:[%s288 + $0xc0] sm:$0xff]
    %v314 = vld [vmem:[%s288 + $0xc8] sm:$0xff]
    %v315 = vld [vmem:[%s288 + $0xd0] sm:$0xff]
    %v316 = vld [vmem:[%s288 + $0xd8] sm:$0xff]
    %v317 = vld [vmem:[%s288 + $0xe0] sm:$0xff]
    %v318 = vld [vmem:[%s288 + $0xe8] sm:$0xff]
    %v319 = vld [vmem:[%s288 + $0xf0] sm:$0xff]
    %v320 = vld [vmem:[%s288 + $0xf8] sm:$0xff]
    %v321 = vsub.f32 %v256, %v289
    %v322 = vsub.f32 %v257, %v290
    %v323 = vsub.f32 %v258, %v291
    %v324 = vsub.f32 %v259, %v292
    %v325 = vsub.f32 %v260, %v293
    %v326 = vsub.f32 %v261, %v294
    %v327 = vsub.f32 %v262, %v295
    %v328 = vsub.f32 %v263, %v296
    %v329 = vsub.f32 %v264, %v297
    %v330 = vsub.f32 %v265, %v298
    %v331 = vsub.f32 %v266, %v299
    %v332 = vsub.f32 %v267, %v300
    %v333 = vsub.f32 %v268, %v301
    %v334 = vsub.f32 %v269, %v302
    %v335 = vsub.f32 %v270, %v303
    %v336 = vsub.f32 %v271, %v304
    %v337 = vsub.f32 %v272, %v305
    %v338 = vsub.f32 %v273, %v306
    %v339 = vsub.f32 %v274, %v307
    %v340 = vsub.f32 %v275, %v308
    %v341 = vsub.f32 %v276, %v309
    %v342 = vsub.f32 %v277, %v310
    %v343 = vsub.f32 %v278, %v311
    %v344 = vsub.f32 %v279, %v312
    %v345 = vsub.f32 %v280, %v313
    %v346 = vsub.f32 %v281, %v314
    %v347 = vsub.f32 %v282, %v315
    %v348 = vsub.f32 %v283, %v316
    %v349 = vsub.f32 %v284, %v317
    %v350 = vsub.f32 %v285, %v318
    %v351 = vsub.f32 %v286, %v319
    %v352 = vsub.f32 %v287, %v320
    %s353 = scalar_lea.vmem [#allocation2], 768
    %v354 = vld [vmem:[%s353] sm:$0xff]
    %v355 = vld [vmem:[%s353 + $0x8] sm:$0xff]
    %v356 = vld [vmem:[%s353 + $0x10] sm:$0xff]
    %v357 = vld [vmem:[%s353 + $0x18] sm:$0xff]
    %v358 = vld [vmem:[%s353 + $0x20] sm:$0xff]
    %v359 = vld [vmem:[%s353 + $0x28] sm:$0xff]
    %v360 = vld [vmem:[%s353 + $0x30] sm:$0xff]
    %v361 = vld [vmem:[%s353 + $0x38] sm:$0xff]
    %v362 = vld [vmem:[%s353 + $0x40] sm:$0xff]
    %v363 = vld [vmem:[%s353 + $0x48] sm:$0xff]
    %v364 = vld [vmem:[%s353 + $0x50] sm:$0xff]
    %v365 = vld [vmem:[%s353 + $0x58] sm:$0xff]
    %v366 = vld [vmem:[%s353 + $0x60] sm:$0xff]
    %v367 = vld [vmem:[%s353 + $0x68] sm:$0xff]
    %v368 = vld [vmem:[%s353 + $0x70] sm:$0xff]
    %v369 = vld [vmem:[%s353 + $0x78] sm:$0xff]
    %v370 = vld [vmem:[%s353 + $0x80] sm:$0xff]
    %v371 = vld [vmem:[%s353 + $0x88] sm:$0xff]
    %v372 = vld [vmem:[%s353 + $0x90] sm:$0xff]
    %v373 = vld [vmem:[%s353 + $0x98] sm:$0xff]
    %v374 = vld [vmem:[%s353 + $0xa0] sm:$0xff]
    %v375 = vld [vmem:[%s353 + $0xa8] sm:$0xff]
    %v376 = vld [vmem:[%s353 + $0xb0] sm:$0xff]
    %v377 = vld [vmem:[%s353 + $0xb8] sm:$0xff]
    %v378 = vld [vmem:[%s353 + $0xc0] sm:$0xff]
    %v379 = vld [vmem:[%s353 + $0xc8] sm:$0xff]
    %v380 = vld [vmem:[%s353 + $0xd0] sm:$0xff]
    %v381 = vld [vmem:[%s353 + $0xd8] sm:$0xff]
    %v382 = vld [vmem:[%s353 + $0xe0] sm:$0xff]
    %v383 = vld [vmem:[%s353 + $0xe8] sm:$0xff]
    %v384 = vld [vmem:[%s353 + $0xf0] sm:$0xff]
    %v385 = vld [vmem:[%s353 + $0xf8] sm:$0xff]
    %s386 = scalar_lea.vmem [#allocation5], 768
    %v387 = vld [vmem:[%s386] sm:$0xff]
    %v388 = vld [vmem:[%s386 + $0x8] sm:$0xff]
    %v389 = vld [vmem:[%s386 + $0x10] sm:$0xff]
    %v390 = vld [vmem:[%s386 + $0x18] sm:$0xff]
    %v391 = vld [vmem:[%s386 + $0x20] sm:$0xff]
    %v392 = vld [vmem:[%s386 + $0x28] sm:$0xff]
    %v393 = vld [vmem:[%s386 + $0x30] sm:$0xff]
    %v394 = vld [vmem:[%s386 + $0x38] sm:$0xff]
    %v395 = vld [vmem:[%s386 + $0x40] sm:$0xff]
    %v396 = vld [vmem:[%s386 + $0x48] sm:$0xff]
    %v397 = vld [vmem:[%s386 + $0x50] sm:$0xff]
    %v398 = vld [vmem:[%s386 + $0x58] sm:$0xff]
    %v399 = vld [vmem:[%s386 + $0x60] sm:$0xff]
    %v400 = vld [vmem:[%s386 + $0x68] sm:$0xff]
    %v401 = vld [vmem:[%s386 + $0x70] sm:$0xff]
    %v402 = vld [vmem:[%s386 + $0x78] sm:$0xff]
    %v403 = vld [vmem:[%s386 + $0x80] sm:$0xff]
    %v404 = vld [vmem:[%s386 + $0x88] sm:$0xff]
    %v405 = vld [vmem:[%s386 + $0x90] sm:$0xff]
    %v406 = vld [vmem:[%s386 + $0x98] sm:$0xff]
    %v407 = vld [vmem:[%s386 + $0xa0] sm:$0xff]
    %v408 = vld [vmem:[%s386 + $0xa8] sm:$0xff]
    %v409 = vld [vmem:[%s386 + $0xb0] sm:$0xff]
    %v410 = vld [vmem:[%s386 + $0xb8] sm:$0xff]
    %v411 = vld [vmem:[%s386 + $0xc0] sm:$0xff]
    %v412 = vld [vmem:[%s386 + $0xc8] sm:$0xff]
    %v413 = vld [vmem:[%s386 + $0xd0] sm:$0xff]
    %v414 = vld [vmem:[%s386 + $0xd8] sm:$0xff]
    %v415 = vld [vmem:[%s386 + $0xe0] sm:$0xff]
    %v416 = vld [vmem:[%s386 + $0xe8] sm:$0xff]
    %v417 = vld [vmem:[%s386 + $0xf0] sm:$0xff]
    %v418 = vld [vmem:[%s386 + $0xf8] sm:$0xff]
    %v419 = vsub.f32 %v354, %v387
    %v420 = vsub.f32 %v355, %v388
    %v421 = vsub.f32 %v356, %v389
    %v422 = vsub.f32 %v357, %v390
    %v423 = vsub.f32 %v358, %v391
    %v424 = vsub.f32 %v359, %v392
    %v425 = vsub.f32 %v360, %v393
    %v426 = vsub.f32 %v361, %v394
    %v427 = vsub.f32 %v362, %v395
    %v428 = vsub.f32 %v363, %v396
    %v429 = vsub.f32 %v364, %v397
    %v430 = vsub.f32 %v365, %v398
    %v431 = vsub.f32 %v366, %v399
    %v432 = vsub.f32 %v367, %v400
    %v433 = vsub.f32 %v368, %v401
    %v434 = vsub.f32 %v369, %v402
    %v435 = vsub.f32 %v370, %v403
    %v436 = vsub.f32 %v371, %v404
    %v437 = vsub.f32 %v372, %v405
    %v438 = vsub.f32 %v373, %v406
    %v439 = vsub.f32 %v374, %v407
    %v440 = vsub.f32 %v375, %v408
    %v441 = vsub.f32 %v376, %v409
    %v442 = vsub.f32 %v377, %v410
    %v443 = vsub.f32 %v378, %v411
    %v444 = vsub.f32 %v379, %v412
    %v445 = vsub.f32 %v380, %v413
    %v446 = vsub.f32 %v381, %v414
    %v447 = vsub.f32 %v382, %v415
    %v448 = vsub.f32 %v383, %v416
    %v449 = vsub.f32 %v384, %v417
    %v450 = vsub.f32 %v385, %v418
    %v451 = vsub.f32 %v321, %v125
    %v452 = vsub.f32 %v322, %v126
    %v453 = vsub.f32 %v323, %v127
    %v454 = vsub.f32 %v324, %v128
    %v455 = vsub.f32 %v325, %v129
    %v456 = vsub.f32 %v326, %v130
    %v457 = vsub.f32 %v327, %v131
    %v458 = vsub.f32 %v328, %v132
    %v459 = vsub.f32 %v329, %v133
    %v460 = vsub.f32 %v330, %v134
    %v461 = vsub.f32 %v331, %v135
    %v462 = vsub.f32 %v332, %v136
    %v463 = vsub.f32 %v333, %v137
    %v464 = vsub.f32 %v334, %v138
    %v465 = vsub.f32 %v335, %v139
    %v466 = vsub.f32 %v336, %v140
    %v467 = vsub.f32 %v337, %v141
    %v468 = vsub.f32 %v338, %v142
    %v469 = vsub.f32 %v339, %v143
    %v470 = vsub.f32 %v340, %v144
    %v471 = vsub.f32 %v341, %v145
    %v472 = vsub.f32 %v342, %v146
    %v473 = vsub.f32 %v343, %v147
    %v474 = vsub.f32 %v344, %v148
    %v475 = vsub.f32 %v345, %v149
    %v476 = vsub.f32 %v346, %v150
    %v477 = vsub.f32 %v347, %v151
    %v478 = vsub.f32 %v348, %v152
    %v479 = vsub.f32 %v349, %v153
    %v480 = vsub.f32 %v350, %v154
    %v481 = vsub.f32 %v351, %v155
    %v482 = vsub.f32 %v352, %v156
    %v483 = vsub.f32 %v419, %v223
    %v484 = vsub.f32 %v420, %v224
    %v485 = vsub.f32 %v421, %v225
    %v486 = vsub.f32 %v422, %v226
    %v487 = vsub.f32 %v423, %v227
    %v488 = vsub.f32 %v424, %v228
    %v489 = vsub.f32 %v425, %v229
    %v490 = vsub.f32 %v426, %v230
    %v491 = vsub.f32 %v427, %v231
    %v492 = vsub.f32 %v428, %v232
    %v493 = vsub.f32 %v429, %v233
    %v494 = vsub.f32 %v430, %v234
    %v495 = vsub.f32 %v431, %v235
    %v496 = vsub.f32 %v432, %v236
    %v497 = vsub.f32 %v433, %v237
    %v498 = vsub.f32 %v434, %v238
    %v499 = vsub.f32 %v435, %v239
    %v500 = vsub.f32 %v436, %v240
    %v501 = vsub.f32 %v437, %v241
    %v502 = vsub.f32 %v438, %v242
    %v503 = vsub.f32 %v439, %v243
    %v504 = vsub.f32 %v440, %v244
    %v505 = vsub.f32 %v441, %v245
    %v506 = vsub.f32 %v442, %v246
    %v507 = vsub.f32 %v443, %v247
    %v508 = vsub.f32 %v444, %v248
    %v509 = vsub.f32 %v445, %v249
    %v510 = vsub.f32 %v446, %v250
    %v511 = vsub.f32 %v447, %v251
    %v512 = vsub.f32 %v448, %v252
    %v513 = vsub.f32 %v449, %v253
    %v514 = vsub.f32 %v450, %v254
    %v515 = vsub.f32 %v223, %v125
    %v516 = vsub.f32 %v224, %v126
    %v517 = vsub.f32 %v225, %v127
    %v518 = vsub.f32 %v226, %v128
    %v519 = vsub.f32 %v227, %v129
    %v520 = vsub.f32 %v228, %v130
    %v521 = vsub.f32 %v229, %v131
    %v522 = vsub.f32 %v230, %v132
    %v523 = vsub.f32 %v231, %v133
    %v524 = vsub.f32 %v232, %v134
    %v525 = vsub.f32 %v233, %v135
    %v526 = vsub.f32 %v234, %v136
    %v527 = vsub.f32 %v235, %v137
    %v528 = vsub.f32 %v236, %v138
    %v529 = vsub.f32 %v237, %v139
    %v530 = vsub.f32 %v238, %v140
    %v531 = vsub.f32 %v239, %v141
    %v532 = vsub.f32 %v240, %v142
    %v533 = vsub.f32 %v241, %v143
    %v534 = vsub.f32 %v242, %v144
    %v535 = vsub.f32 %v243, %v145
    %v536 = vsub.f32 %v244, %v146
    %v537 = vsub.f32 %v245, %v147
    %v538 = vsub.f32 %v246, %v148
    %v539 = vsub.f32 %v247, %v149
    %v540 = vsub.f32 %v248, %v150
    %v541 = vsub.f32 %v249, %v151
    %v542 = vsub.f32 %v250, %v152
    %v543 = vsub.f32 %v251, %v153
    %v544 = vsub.f32 %v252, %v154
    %v545 = vsub.f32 %v253, %v155
    %v546 = vsub.f32 %v254, %v156
    %v547 = vsub.f32 %v419, %v321
    %v548 = vsub.f32 %v420, %v322
    %v549 = vsub.f32 %v421, %v323
    %v550 = vsub.f32 %v422, %v324
    %v551 = vsub.f32 %v423, %v325
    %v552 = vsub.f32 %v424, %v326
    %v553 = vsub.f32 %v425, %v327
    %v554 = vsub.f32 %v426, %v328
    %v555 = vsub.f32 %v427, %v329
    %v556 = vsub.f32 %v428, %v330
    %v557 = vsub.f32 %v429, %v331
    %v558 = vsub.f32 %v430, %v332
    %v559 = vsub.f32 %v431, %v333
    %v560 = vsub.f32 %v432, %v334
    %v561 = vsub.f32 %v433, %v335
    %v562 = vsub.f32 %v434, %v336
    %v563 = vsub.f32 %v435, %v337
    %v564 = vsub.f32 %v436, %v338
    %v565 = vsub.f32 %v437, %v339
    %v566 = vsub.f32 %v438, %v340
    %v567 = vsub.f32 %v439, %v341
    %v568 = vsub.f32 %v440, %v342
    %v569 = vsub.f32 %v441, %v343
    %v570 = vsub.f32 %v442, %v344
    %v571 = vsub.f32 %v443, %v345
    %v572 = vsub.f32 %v444, %v346
    %v573 = vsub.f32 %v445, %v347
    %v574 = vsub.f32 %v446, %v348
    %v575 = vsub.f32 %v447, %v349
    %v576 = vsub.f32 %v448, %v350
    %v577 = vsub.f32 %v449, %v351
    %v578 = vsub.f32 %v450, %v352
    %v579 = vmul.f32 %v451, %v451
    %v580 = vmul.f32 %v452, %v452
    %v581 = vmul.f32 %v453, %v453
    %v582 = vmul.f32 %v454, %v454
    %v583 = vmul.f32 %v455, %v455
    %v584 = vmul.f32 %v456, %v456
    %v585 = vmul.f32 %v457, %v457
    %v586 = vmul.f32 %v458, %v458
    %v587 = vmul.f32 %v459, %v459
    %v588 = vmul.f32 %v460, %v460
    %v589 = vmul.f32 %v461, %v461
    %v590 = vmul.f32 %v462, %v462
    %v591 = vmul.f32 %v463, %v463
    %v592 = vmul.f32 %v464, %v464
    %v593 = vmul.f32 %v465, %v465
    %v594 = vmul.f32 %v466, %v466
    %v595 = vmul.f32 %v467, %v467
    %v596 = vmul.f32 %v468, %v468
    %v597 = vmul.f32 %v469, %v469
    %v598 = vmul.f32 %v470, %v470
    %v599 = vmul.f32 %v471, %v471
    %v600 = vmul.f32 %v472, %v472
    %v601 = vmul.f32 %v473, %v473
    %v602 = vmul.f32 %v474, %v474
    %v603 = vmul.f32 %v475, %v475
    %v604 = vmul.f32 %v476, %v476
    %v605 = vmul.f32 %v477, %v477
    %v606 = vmul.f32 %v478, %v478
    %v607 = vmul.f32 %v479, %v479
    %v608 = vmul.f32 %v480, %v480
    %v609 = vmul.f32 %v481, %v481
    %v610 = vmul.f32 %v482, %v482
    %v611 = vmul.f32 %v483, %v483
    %v612 = vmul.f32 %v484, %v484
    %v613 = vmul.f32 %v485, %v485
    %v614 = vmul.f32 %v486, %v486
    %v615 = vmul.f32 %v487, %v487
    %v616 = vmul.f32 %v488, %v488
    %v617 = vmul.f32 %v489, %v489
    %v618 = vmul.f32 %v490, %v490
    %v619 = vmul.f32 %v491, %v491
    %v620 = vmul.f32 %v492, %v492
    %v621 = vmul.f32 %v493, %v493
    %v622 = vmul.f32 %v494, %v494
    %v623 = vmul.f32 %v495, %v495
    %v624 = vmul.f32 %v496, %v496
    %v625 = vmul.f32 %v497, %v497
    %v626 = vmul.f32 %v498, %v498
    %v627 = vmul.f32 %v499, %v499
    %v628 = vmul.f32 %v500, %v500
    %v629 = vmul.f32 %v501, %v501
    %v630 = vmul.f32 %v502, %v502
    %v631 = vmul.f32 %v503, %v503
    %v632 = vmul.f32 %v504, %v504
    %v633 = vmul.f32 %v505, %v505
    %v634 = vmul.f32 %v506, %v506
    %v635 = vmul.f32 %v507, %v507
    %v636 = vmul.f32 %v508, %v508
    %v637 = vmul.f32 %v509, %v509
    %v638 = vmul.f32 %v510, %v510
    %v639 = vmul.f32 %v511, %v511
    %v640 = vmul.f32 %v512, %v512
    %v641 = vmul.f32 %v513, %v513
    %v642 = vmul.f32 %v514, %v514
    %v643 = vadd.f32 %v579, %v611
    %v644 = vadd.f32 %v580, %v612
    %v645 = vadd.f32 %v581, %v613
    %v646 = vadd.f32 %v582, %v614
    %v647 = vadd.f32 %v583, %v615
    %v648 = vadd.f32 %v584, %v616
    %v649 = vadd.f32 %v585, %v617
    %v650 = vadd.f32 %v586, %v618
    %v651 = vadd.f32 %v587, %v619
    %v652 = vadd.f32 %v588, %v620
    %v653 = vadd.f32 %v589, %v621
    %v654 = vadd.f32 %v590, %v622
    %v655 = vadd.f32 %v591, %v623
    %v656 = vadd.f32 %v592, %v624
    %v657 = vadd.f32 %v593, %v625
    %v658 = vadd.f32 %v594, %v626
    %v659 = vadd.f32 %v595, %v627
    %v660 = vadd.f32 %v596, %v628
    %v661 = vadd.f32 %v597, %v629
    %v662 = vadd.f32 %v598, %v630
    %v663 = vadd.f32 %v599, %v631
    %v664 = vadd.f32 %v600, %v632
    %v665 = vadd.f32 %v601, %v633
    %v666 = vadd.f32 %v602, %v634
    %v667 = vadd.f32 %v603, %v635
    %v668 = vadd.f32 %v604, %v636
    %v669 = vadd.f32 %v605, %v637
    %v670 = vadd.f32 %v606, %v638
    %v671 = vadd.f32 %v607, %v639
    %v672 = vadd.f32 %v608, %v640
    %v673 = vadd.f32 %v609, %v641
    %v674 = vadd.f32 %v610, %v642
    %v675 = vmul.f32 %v515, %v515
    %v676 = vmul.f32 %v516, %v516
    %v677 = vmul.f32 %v517, %v517
    %v678 = vmul.f32 %v518, %v518
    %v679 = vmul.f32 %v519, %v519
    %v680 = vmul.f32 %v520, %v520
    %v681 = vmul.f32 %v521, %v521
    %v682 = vmul.f32 %v522, %v522
    %v683 = vmul.f32 %v523, %v523
    %v684 = vmul.f32 %v524, %v524
    %v685 = vmul.f32 %v525, %v525
    %v686 = vmul.f32 %v526, %v526
    %v687 = vmul.f32 %v527, %v527
    %v688 = vmul.f32 %v528, %v528
    %v689 = vmul.f32 %v529, %v529
    %v690 = vmul.f32 %v530, %v530
    %v691 = vmul.f32 %v531, %v531
    %v692 = vmul.f32 %v532, %v532
    %v693 = vmul.f32 %v533, %v533
    %v694 = vmul.f32 %v534, %v534
    %v695 = vmul.f32 %v535, %v535
    %v696 = vmul.f32 %v536, %v536
    %v697 = vmul.f32 %v537, %v537
    %v698 = vmul.f32 %v538, %v538
    %v699 = vmul.f32 %v539, %v539
    %v700 = vmul.f32 %v540, %v540
    %v701 = vmul.f32 %v541, %v541
    %v702 = vmul.f32 %v542, %v542
    %v703 = vmul.f32 %v543, %v543
    %v704 = vmul.f32 %v544, %v544
    %v705 = vmul.f32 %v545, %v545
    %v706 = vmul.f32 %v546, %v546
    %v707 = vadd.f32 %v643, %v675
    %v708 = vadd.f32 %v644, %v676
    %v709 = vadd.f32 %v645, %v677
    %v710 = vadd.f32 %v646, %v678
    %v711 = vadd.f32 %v647, %v679
    %v712 = vadd.f32 %v648, %v680
    %v713 = vadd.f32 %v649, %v681
    %v714 = vadd.f32 %v650, %v682
    %v715 = vadd.f32 %v651, %v683
    %v716 = vadd.f32 %v652, %v684
    %v717 = vadd.f32 %v653, %v685
    %v718 = vadd.f32 %v654, %v686
    %v719 = vadd.f32 %v655, %v687
    %v720 = vadd.f32 %v656, %v688
    %v721 = vadd.f32 %v657, %v689
    %v722 = vadd.f32 %v658, %v690
    %v723 = vadd.f32 %v659, %v691
    %v724 = vadd.f32 %v660, %v692
    %v725 = vadd.f32 %v661, %v693
    %v726 = vadd.f32 %v662, %v694
    %v727 = vadd.f32 %v663, %v695
    %v728 = vadd.f32 %v664, %v696
    %v729 = vadd.f32 %v665, %v697
    %v730 = vadd.f32 %v666, %v698
    %v731 = vadd.f32 %v667, %v699
    %v732 = vadd.f32 %v668, %v700
    %v733 = vadd.f32 %v669, %v701
    %v734 = vadd.f32 %v670, %v702
    %v735 = vadd.f32 %v671, %v703
    %v736 = vadd.f32 %v672, %v704
    %v737 = vadd.f32 %v673, %v705
    %v738 = vadd.f32 %v674, %v706
    %v739 = vmul.f32 %v547, %v547
    %v740 = vmul.f32 %v548, %v548
    %v741 = vmul.f32 %v549, %v549
    %v742 = vmul.f32 %v550, %v550
    %v743 = vmul.f32 %v551, %v551
    %v744 = vmul.f32 %v552, %v552
    %v745 = vmul.f32 %v553, %v553
    %v746 = vmul.f32 %v554, %v554
    %v747 = vmul.f32 %v555, %v555
    %v748 = vmul.f32 %v556, %v556
    %v749 = vmul.f32 %v557, %v557
    %v750 = vmul.f32 %v558, %v558
    %v751 = vmul.f32 %v559, %v559
    %v752 = vmul.f32 %v560, %v560
    %v753 = vmul.f32 %v561, %v561
    %v754 = vmul.f32 %v562, %v562
    %v755 = vmul.f32 %v563, %v563
    %v756 = vmul.f32 %v564, %v564
    %v757 = vmul.f32 %v565, %v565
    %v758 = vmul.f32 %v566, %v566
    %v759 = vmul.f32 %v567, %v567
    %v760 = vmul.f32 %v568, %v568
    %v761 = vmul.f32 %v569, %v569
    %v762 = vmul.f32 %v570, %v570
    %v763 = vmul.f32 %v571, %v571
    %v764 = vmul.f32 %v572, %v572
    %v765 = vmul.f32 %v573, %v573
    %v766 = vmul.f32 %v574, %v574
    %v767 = vmul.f32 %v575, %v575
    %v768 = vmul.f32 %v576, %v576
    %v769 = vmul.f32 %v577, %v577
    %v770 = vmul.f32 %v578, %v578
    %v771 = vadd.f32 %v707, %v739
    %v772 = vadd.f32 %v708, %v740
    %v773 = vadd.f32 %v709, %v741
    %v774 = vadd.f32 %v710, %v742
    %v775 = vadd.f32 %v711, %v743
    %v776 = vadd.f32 %v712, %v744
    %v777 = vadd.f32 %v713, %v745
    %v778 = vadd.f32 %v714, %v746
    %v779 = vadd.f32 %v715, %v747
    %v780 = vadd.f32 %v716, %v748
    %v781 = vadd.f32 %v717, %v749
    %v782 = vadd.f32 %v718, %v750
    %v783 = vadd.f32 %v719, %v751
    %v784 = vadd.f32 %v720, %v752
    %v785 = vadd.f32 %v721, %v753
    %v786 = vadd.f32 %v722, %v754
    %v787 = vadd.f32 %v723, %v755
    %v788 = vadd.f32 %v724, %v756
    %v789 = vadd.f32 %v725, %v757
    %v790 = vadd.f32 %v726, %v758
    %v791 = vadd.f32 %v727, %v759
    %v792 = vadd.f32 %v728, %v760
    %v793 = vadd.f32 %v729, %v761
    %v794 = vadd.f32 %v730, %v762
    %v795 = vadd.f32 %v731, %v763
    %v796 = vadd.f32 %v732, %v764
    %v797 = vadd.f32 %v733, %v765
    %v798 = vadd.f32 %v734, %v766
    %v799 = vadd.f32 %v735, %v767
    %v800 = vadd.f32 %v736, %v768
    %v801 = vadd.f32 %v737, %v769
    %v802 = vadd.f32 %v738, %v770
    %v803 = vld [vmem:[#allocation7] sm:$0xff]
    %v804 = vadd.f32 %v771, %v772
    %v805 = vadd.f32 %v804, %v773
    %v806 = vadd.f32 %v805, %v774
    %v807 = vadd.f32 %v806, %v775
    %v808 = vadd.f32 %v807, %v776
    %v809 = vadd.f32 %v808, %v777
    %v810 = vadd.f32 %v809, %v778
    %v811 = vadd.f32 %v810, %v779
    %v812 = vadd.f32 %v811, %v780
    %v813 = vadd.f32 %v812, %v781
    %v814 = vadd.f32 %v813, %v782
    %v815 = vadd.f32 %v814, %v783
    %v816 = vadd.f32 %v815, %v784
    %v817 = vadd.f32 %v816, %v785
    %v818 = vadd.f32 %v817, %v786
    %v819 = vadd.f32 %v818, %v787
    %v820 = vadd.f32 %v819, %v788
    %v821 = vadd.f32 %v820, %v789
    %v822 = vadd.f32 %v821, %v790
    %v823 = vadd.f32 %v822, %v791
    %v824 = vadd.f32 %v823, %v792
    %v825 = vadd.f32 %v824, %v793
    %v826 = vadd.f32 %v825, %v794
    %v827 = vadd.f32 %v826, %v795
    %v828 = vadd.f32 %v827, %v796
    %v829 = vadd.f32 %v828, %v797
    %v830 = vadd.f32 %v829, %v798
    %v831 = vadd.f32 %v830, %v799
    %v832 = vadd.f32 %v831, %v800
    %v833 = vadd.f32 %v832, %v801
    %v834 = vadd.f32 %v833, %v802
    %v835 = vadd.f32 %v803, %v834
    %836 = vst [vmem:[#allocation7] sm:$0xff] %v835
    // Predicated region
    $region22: #{tpu_custom_call.1} parent=1 // pred_check
      _
    $region23: #{tpu_custom_call.1} parent=1 // pred_check_branch
      %838 = sbr.rel (0) target = $region25
    $region24: #{tpu_custom_call.1} parent=1 // pred_region
      %840 = vsyncadd [#allocation4], 0
      %s842 = sshll.u32 [#allocation7], 4
      %s843 = int_to_ptr.vmem [resolvable:$true] %s842
      %s844 = sshll.u32 %s2, 4
      %s845 = int_to_ptr.hbm [resolvable:$true] %s844
      %847 = dma.vmem_to_hbm [thread:$0]  %s843, 128, %s845, [#allocation4]
    $region25: #{tpu_custom_call.1} parent=1 // pred_fallthru
      _
    // Predicated region
    $region26: #{tpu_custom_call.1} parent=1 // pred_check
      _
    $region27: #{tpu_custom_call.1} parent=1 // pred_check_branch
      %849 = sbr.rel (0) target = $region29
    $region28: #{tpu_custom_call.1} parent=1 // pred_region
      %851 = dma.done [#allocation4], 128
    $region29: #{tpu_custom_call.1} parent=1 // pred_fallthru
      _
    %852 = vsyncpa [#allocation3], 1
    %853 = vsyncpa [#allocation6], 1
    %854 = vsyncpa [#allocation4], 1

</llo_original>
